<compile_context>
chip_gen: v7x
topology: tpu7x:2x2x1
jax: 0.10.0
libtpu: 0.0.40
codegen_flags: <defaults>
</compile_context>

<pallas_src>
import functools

import jax
import jax.numpy as jnp
from jax import lax
from jax.experimental import pallas as pl
from jax.experimental.pallas import tpu as pltpu


def _attn_pool_kernel(att_ref, feat_ref, out_ref, acc_ref, asum_ref, *,
                      norm, bt, hw_true):
    """One (batch-group, K-tile) grid step.

    att_ref : (Bt, M, TK) attention tile   (native dtype)
    feat_ref: (Bt, N, TK) feature tile     (native dtype)
    out_ref : (Bt, M, N)  output block     (written only on the last K step)
    acc_ref : (Bt, N, M)  f32 accumulator scratch
    asum_ref: (Bt, M, 1)  f32 per-map spatial-sum scratch (norm 1/3 only)
    """
    k = pl.program_id(1)

    @pl.when(k == 0)
    def _init():
        acc_ref[...] = jnp.zeros_like(acc_ref)
        if norm in (1, 3):
            asum_ref[...] = jnp.zeros_like(asum_ref)

    for bi in range(bt):  # short static unroll over the folded batch elements
        a = att_ref[bi]                       # (M, TK)
        f = feat_ref[bi]                      # (N, TK)
        if norm == 1:
            # eps applied to the *small* attention tile only; padded spatial
            # lanes multiply zero-padded features, so they contribute nothing.
            a = a + 1e-08
        # (N, TK) x (M, TK)^T -> (N, M): the large feature tile is the plain
        # lhs; only the small attention tile is on the transposed-rhs side.
        acc_ref[bi] += lax.dot_general(
            f, a,
            dimension_numbers=(((1,), (1,)), ((), ())),
            preferred_element_type=jnp.float32,
        )
        if norm in (1, 3):
            asum_ref[bi] += jnp.sum(att_ref[bi].astype(jnp.float32),
                                    axis=-1, keepdims=True)

    @pl.when(k == pl.num_programs(1) - 1)
    def _finalize():
        for bi in range(bt):
            fm = acc_ref[bi].T                # small (N, M) -> (M, N) epilogue transpose
            if norm == 1:
                # sum over true HW of (a + 1e-8); asum holds the raw-a sum.
                w = asum_ref[bi] + hw_true * 1e-08
                fm = fm / w
            elif norm == 2:
                l2 = jnp.sqrt(jnp.sum(fm * fm, axis=-1, keepdims=True))
                fm = fm / jnp.maximum(l2, 1e-12)
            elif norm == 3:
                w = asum_ref[bi] + 1e-08
                fm = fm / w
            out_ref[bi] = fm.astype(out_ref.dtype)


def _bilinear_align_corners(x, out_h, out_w):
    """PyTorch F.interpolate(mode='bilinear', align_corners=True) on NCHW."""
    B, C, H, W = x.shape
    if (H, W) == (out_h, out_w):
        return x
    ys = jnp.linspace(0.0, H - 1.0, out_h) if out_h > 1 else jnp.zeros((1,))
    xs = jnp.linspace(0.0, W - 1.0, out_w) if out_w > 1 else jnp.zeros((1,))
    y0 = jnp.floor(ys).astype(jnp.int32)
    x0 = jnp.floor(xs).astype(jnp.int32)
    y1 = jnp.minimum(y0 + 1, H - 1)
    x1 = jnp.minimum(x0 + 1, W - 1)
    wy = (ys - y0.astype(ys.dtype))[:, None]
    wx = (xs - x0.astype(xs.dtype))[None, :]
    v00 = x[:, :, y0][:, :, :, x0]
    v01 = x[:, :, y0][:, :, :, x1]
    v10 = x[:, :, y1][:, :, :, x0]
    v11 = x[:, :, y1][:, :, :, x1]
    top = v00 * (1.0 - wx) + v01 * wx
    bot = v10 * (1.0 - wx) + v11 * wx
    return (top * (1.0 - wy) + bot * wy).astype(x.dtype)


def _vmem_tile_bytes(shape, itemsize):
    """Real VMEM footprint of a tile: last dim pads to 128 lanes, 2nd-last to 8."""
    s = list(shape)
    if len(s) >= 1:
        s[-1] = -(-s[-1] // 128) * 128
    if len(s) >= 2:
        s[-2] = -(-s[-2] // 8) * 8
    n = 1
    for d in s:
        n *= int(d)
    return n * int(itemsize)


def attention_pooling(features, attentions, norm=2, *, tk=None, bt=None,
                      vmem_target_bytes=None):
    """features: (B, N, H, W), attentions: (B, M, AH, AW) -> (B, M, N)."""
    if features.ndim != 4:
        # TODO(synk): 5-D features path (einsum 'imjk,imnjk->imn') not implemented.
        raise NotImplementedError("only the 4-D features path is implemented")
    B, N, H, W = features.shape
    Ba, M, AH, AW = attentions.shape
    assert Ba == B, (Ba, B)

    if (AH, AW) != (H, W):
        attentions = _bilinear_align_corners(attentions, H, W)

    # Keep native dtypes (no wrapper-side f32 astype); only equalize the two
    # operand dtypes (normally a no-op).
    common = jnp.result_type(features.dtype, attentions.dtype)
    out_dtype = common
    if attentions.dtype != common:
        attentions = attentions.astype(common)
    if features.dtype != common:
        features = features.astype(common)
    itemsize = jnp.dtype(common).itemsize

    HW = H * W
    att_flat = attentions.reshape(B, M, HW)
    feat_flat = features.reshape(B, N, HW)

    # VMEM budget ~60% of physical VMEM (64 MiB v7x / 128 MiB v5e,v6e).
    try:
        cap = int(pltpu.get_tpu_info().vmem_capacity_bytes)
    except Exception:
        cap = 64 * 1024 * 1024
    if vmem_target_bytes is None:
        vmem_target_bytes = min(int(cap * 0.6), 80 * 1024 * 1024)

    def fixed_bytes(bt_):
        return (_vmem_tile_bytes((bt_, N, M), 4)            # f32 accumulator scratch
                + _vmem_tile_bytes((bt_, M, 1), 4)           # f32 attention-sum scratch
                + 2 * _vmem_tile_bytes((bt_, M, N), itemsize)  # double-buffered output
                + (2 << 20))                                 # misc slack

    # Fold a few batch elements per grid step to amortize per-step overhead,
    # as long as the per-step resident (non-streamed) footprint stays small.
    if bt is None:
        bt = 1
        for cand in (8, 4, 2):
            if B % cand == 0 and fixed_bytes(cand) <= vmem_target_bytes // 3:
                bt = cand
                break
    assert B % bt == 0, (B, bt)

    fixed = fixed_bytes(bt)
    m8 = -(-M // 8) * 8
    n8 = -(-N // 8) * 8
    # Double-buffered streamed input blocks, per unit of TK (TK is lane-aligned).
    stream_per_tk = 2 * bt * (m8 + n8) * itemsize

    hw128 = -(-HW // 128) * 128
    if tk is None:
        tk = max((vmem_target_bytes - fixed) // stream_per_tk, 128)
        tk = int(tk // 128 * 128)
        tk = min(tk, hw128)                     # no bigger than (padded) HW
    tk = max(128, (int(tk) + 127) // 128 * 128)

    # Zero-pad the contraction axis up to a multiple of TK (exact no-op for
    # every norm branch given the eps bookkeeping inside the kernel).
    hwp = -(-HW // tk) * tk
    if hwp != HW:
        pad = ((0, 0), (0, 0), (0, hwp - HW))
        att_flat = jnp.pad(att_flat, pad)
        feat_flat = jnp.pad(feat_flat, pad)

    grid = (B // bt, hwp // tk)

    need = stream_per_tk * tk + fixed
    vmem_limit = int(min(max(need + (8 << 20), 32 << 20), int(cap * 0.9)))

    cost = pl.CostEstimate(
        flops=2 * B * M * N * HW,
        transcendentals=0,
        bytes_accessed=B * (M + N) * HW * itemsize + B * M * N * itemsize,
    )

    kernel = functools.partial(_attn_pool_kernel, norm=norm, bt=bt, hw_true=HW)

    return pl.pallas_call(
        kernel,
        out_shape=jax.ShapeDtypeStruct((B, M, N), out_dtype),
        grid_spec=pltpu.PrefetchScalarGridSpec(
            num_scalar_prefetch=0,
            grid=grid,
            in_specs=[
                pl.BlockSpec((bt, M, tk), lambda b, k: (b, 0, k)),
                pl.BlockSpec((bt, N, tk), lambda b, k: (b, 0, k)),
            ],
            out_specs=pl.BlockSpec((bt, M, N), lambda b, k: (b, 0, 0)),
            scratch_shapes=[
                pltpu.VMEM((bt, N, M), jnp.float32),
                pltpu.VMEM((bt, M, 1), jnp.float32),
            ],
        ),
        compiler_params=pltpu.CompilerParams(
            dimension_semantics=("parallel", "arbitrary"),
            vmem_limit_bytes=vmem_limit,
        ),
        cost_estimate=cost,
    )(att_flat, feat_flat)


def _reference(features, attentions, norm=2):
    """Pure-JAX (f32) reference mirroring the PyTorch forward (4-D path)."""
    features = features.astype(jnp.float32)
    attentions = attentions.astype(jnp.float32)
    B, N, H, W = features.shape
    _, M, AH, AW = attentions.shape
    if (AH, AW) != (H, W):
        attentions = _bilinear_align_corners(attentions, H, W)
    if norm == 1:
        attentions = attentions + 1e-08
    fm = jnp.einsum('imjk,injk->imn', attentions, features)
    if norm == 1:
        fm = fm / jnp.sum(attentions, axis=(2, 3))[..., None]
    if norm == 2:
        l2 = jnp.sqrt(jnp.sum(fm * fm, axis=-1, keepdims=True))
        fm = fm / jnp.maximum(l2, 1e-12)
    if norm == 3:
        fm = fm / (jnp.sum(attentions, axis=(2, 3))[..., None] + 1e-08)
    return fm


if __name__ == "__main__":
    key = jax.random.PRNGKey(0)
    k1, k2, k3, k4, k5, k6 = jax.random.split(key, 6)

    def _check(out, ref, tol, name):
        o = out.astype(jnp.float32)
        err = float(jnp.max(jnp.abs(o - ref)))
        assert jnp.allclose(o, ref, atol=tol, rtol=tol), (name, err)

    # Case 1: default norm=2, f32; tk=128 forces a multi-step K (HW) reduction.
    B, N, M, H, W = 2, 128, 8, 16, 16
    feats = jax.random.normal(k1, (B, N, H, W), dtype=jnp.float32)
    atts = jnp.abs(jax.random.normal(k2, (B, M, H, W), dtype=jnp.float32))
    out = jax.block_until_ready(attention_pooling(feats, atts, tk=128))
    assert out.shape == (B, M, N), out.shape
    _check(out, _reference(feats, atts, norm=2), 1e-5, "norm2")

    # Case 2: norm=1, attention maps at a different spatial size (bilinear
    # align_corners resize) and HW=144 not a multiple of tk (padded K tile).
    H2 = W2 = 12
    feats2 = jax.random.normal(k3, (B, N, H2, W2), dtype=jnp.float32)
    atts2 = jnp.abs(jax.random.normal(k4, (B, M, 8, 8), dtype=jnp.float32))
    out2 = jax.block_until_ready(attention_pooling(feats2, atts2, norm=1, tk=128))
    _check(out2, _reference(feats2, atts2, norm=1), 1e-5, "norm1")

    # Case 3: norm=3 with native bf16 inputs fed straight to the MXU.
    feats3 = jax.random.normal(k5, (B, N, H, W), dtype=jnp.float32).astype(jnp.bfloat16)
    atts3 = jnp.abs(jax.random.normal(k6, (B, M, H, W), dtype=jnp.float32)).astype(jnp.bfloat16)
    out3 = jax.block_until_ready(attention_pooling(feats3, atts3, norm=3))
    assert out3.dtype == jnp.bfloat16, out3.dtype
    _check(out3, _reference(feats3, atts3, norm=3), 2e-2, "norm3-bf16")

    print("KERNEL_OK")
</pallas_src>

<mosaic_0001>
module attributes {stable_mosaic.version = 11 : i64} {
  func.func @_attn_pool_kernel(%arg0: i32, %arg1: i32, %arg2: memref<2x8x128xf32, #tpu.memory_space<vmem>>, %arg3: memref<2x128x128xf32, #tpu.memory_space<vmem>>, %arg4: memref<2x8x128xf32, #tpu.memory_space<vmem>>, %arg5: memref<2x128x8xf32, #tpu.memory_space<vmem>>, %arg6: memref<2x8x1xf32, #tpu.memory_space<vmem>>) attributes {dimension_semantics = [#tpu.dimension_semantics<parallel>, #tpu.dimension_semantics<arbitrary>], iteration_bounds = array<i64: 1, 2>, scalar_prefetch = 0 : i64, scratch_operands = 2 : i64, tpu.core_type = #tpu.core_type<tc>, window_params = [{transform_indices = @transform_0, window_bounds = array<i64: 2, 8, 128>}, {transform_indices = @transform_1, window_bounds = array<i64: 2, 128, 128>}, {transform_indices = @transform_2, window_bounds = array<i64: 2, 8, 128>}]} {
    %c0_i32 = arith.constant 0 : i32
    %0 = arith.cmpi eq, %arg1, %c0_i32 : i32
    %1 = arith.extui %0 : i1 to i32
    %c0_i32_0 = arith.constant 0 : i32
    %2 = arith.cmpi ne, %1, %c0_i32_0 : i32
    scf.if %2 {
      %cst_25 = arith.constant 0.000000e+00 : f32
      %28 = vector.broadcast %cst_25 : f32 to vector<2x128x8xf32>
      %c0_26 = arith.constant 0 : index
      %c0_27 = arith.constant 0 : index
      %c0_28 = arith.constant 0 : index
      %29 = vector.load %arg5[%c0_26, %c0_27, %c0_28] : memref<2x128x8xf32, #tpu.memory_space<vmem>>, vector<2x128x8xf32>
      tpu.vector_store %arg5[%c0_26, %c0_27, %c0_28], %28 {strides = array<i32>} : memref<2x128x8xf32, #tpu.memory_space<vmem>>, vector<2x128x8xf32>,
    } else {
    }
    %c0 = arith.constant 0 : index
    %c0_1 = arith.constant 0 : index
    %c0_2 = arith.constant 0 : index
    %3 = vector.load %arg2[%c0, %c0_1, %c0_2] : memref<2x8x128xf32, #tpu.memory_space<vmem>>, vector<1x8x128xf32>
    %4 = vector.shape_cast %3 : vector<1x8x128xf32> to vector<8x128xf32>
    %c0_3 = arith.constant 0 : index
    %c0_4 = arith.constant 0 : index
    %c0_5 = arith.constant 0 : index
    %5 = vector.load %arg3[%c0_3, %c0_4, %c0_5] : memref<2x128x128xf32, #tpu.memory_space<vmem>>, vector<1x128x128xf32>
    %6 = vector.shape_cast %5 : vector<1x128x128xf32> to vector<128x128xf32>
    %c0_6 = arith.constant 0 : index
    %c0_7 = arith.constant 0 : index
    %c0_8 = arith.constant 0 : index
    %7 = vector.load %arg5[%c0_6, %c0_7, %c0_8] : memref<2x128x8xf32, #tpu.memory_space<vmem>>, vector<1x128x8xf32>
    %8 = vector.shape_cast %7 : vector<1x128x8xf32> to vector<128x8xf32>
    %cst = arith.constant dense<0.000000e+00> : vector<128x8xf32>
    %9 = tpu.matmul %6, %4, %cst {dimension_numbers = #tpu.dot_dimension_numbers<[1], [1], [0], [0], [0, 0, 1, 0], [], []>} : vector<128x128xf32>, vector<8x128xf32>, vector<128x8xf32> -> vector<128x8xf32>
    %10 = arith.addf %8, %9 : vector<128x8xf32>
    %c0_9 = arith.constant 0 : index
    %c0_10 = arith.constant 0 : index
    %c0_11 = arith.constant 0 : index
    %11 = vector.load %arg5[%c0_9, %c0_10, %c0_11] : memref<2x128x8xf32, #tpu.memory_space<vmem>>, vector<1x128x8xf32>
    %12 = vector.shape_cast %11 : vector<1x128x8xf32> to vector<128x8xf32>
    %13 = vector.shape_cast %10 : vector<128x8xf32> to vector<1x128x8xf32>
    tpu.vector_store %arg5[%c0_9, %c0_10, %c0_11], %13 {strides = array<i32>} : memref<2x128x8xf32, #tpu.memory_space<vmem>>, vector<1x128x8xf32>,
    %c1 = arith.constant 1 : index
    %c0_12 = arith.constant 0 : index
    %c0_13 = arith.constant 0 : index
    %14 = vector.load %arg2[%c1, %c0_12, %c0_13] : memref<2x8x128xf32, #tpu.memory_space<vmem>>, vector<1x8x128xf32>
    %15 = vector.shape_cast %14 : vector<1x8x128xf32> to vector<8x128xf32>
    %c1_14 = arith.constant 1 : index
    %c0_15 = arith.constant 0 : index
    %c0_16 = arith.constant 0 : index
    %16 = vector.load %arg3[%c1_14, %c0_15, %c0_16] : memref<2x128x128xf32, #tpu.memory_space<vmem>>, vector<1x128x128xf32>
    %17 = vector.shape_cast %16 : vector<1x128x128xf32> to vector<128x128xf32>
    %c1_17 = arith.constant 1 : index
    %c0_18 = arith.constant 0 : index
    %c0_19 = arith.constant 0 : index
    %18 = vector.load %arg5[%c1_17, %c0_18, %c0_19] : memref<2x128x8xf32, #tpu.memory_space<vmem>>, vector<1x128x8xf32>
    %19 = vector.shape_cast %18 : vector<1x128x8xf32> to vector<128x8xf32>
    %cst_20 = arith.constant dense<0.000000e+00> : vector<128x8xf32>
    %20 = tpu.matmul %17, %15, %cst_20 {dimension_numbers = #tpu.dot_dimension_numbers<[1], [1], [0], [0], [0, 0, 1, 0], [], []>} : vector<128x128xf32>, vector<8x128xf32>, vector<128x8xf32> -> vector<128x8xf32>
    %21 = arith.addf %19, %20 : vector<128x8xf32>
    %c1_21 = arith.constant 1 : index
    %c0_22 = arith.constant 0 : index
    %c0_23 = arith.constant 0 : index
    %22 = vector.load %arg5[%c1_21, %c0_22, %c0_23] : memref<2x128x8xf32, #tpu.memory_space<vmem>>, vector<1x128x8xf32>
    %23 = vector.shape_cast %22 : vector<1x128x8xf32> to vector<128x8xf32>
    %24 = vector.shape_cast %21 : vector<128x8xf32> to vector<1x128x8xf32>
    tpu.vector_store %arg5[%c1_21, %c0_22, %c0_23], %24 {strides = array<i32>} : memref<2x128x8xf32, #tpu.memory_space<vmem>>, vector<1x128x8xf32>,
    %c1_i32 = arith.constant 1 : i32
    %25 = arith.cmpi eq, %arg1, %c1_i32 : i32
    %26 = arith.extui %25 : i1 to i32
    %c0_i32_24 = arith.constant 0 : i32
    %27 = arith.cmpi ne, %26, %c0_i32_24 : i32
    scf.if %27 {
      %c0_25 = arith.constant 0 : index
      %c0_26 = arith.constant 0 : index
      %c0_27 = arith.constant 0 : index
      %28 = vector.load %arg5[%c0_25, %c0_26, %c0_27] : memref<2x128x8xf32, #tpu.memory_space<vmem>>, vector<1x128x8xf32>
      %29 = vector.shape_cast %28 : vector<1x128x8xf32> to vector<128x8xf32>
      %30 = tpu.transpose %29, [1, 0] : vector<128x8xf32> -> vector<8x128xf32>
      %31 = arith.mulf %30, %30 : vector<8x128xf32>
      %cst_28 = arith.constant dense<0.000000e+00> : vector<8xf32>
      %32 = vector.multi_reduction <add>, %31, %cst_28 [1] : vector<8x128xf32> to vector<8xf32>
      %33 = vector.shape_cast %32 : vector<8xf32> to vector<8x1xf32>
      %34 = math.sqrt %33 : vector<8x1xf32>
      %cst_29 = arith.constant 9.99999996E-13 : f32
      %35 = vector.broadcast %cst_29 : f32 to vector<8x1xf32>
      %36 = arith.maximumf %34, %35 : vector<8x1xf32>
      %37 = vector.broadcast %36 : vector<8x1xf32> to vector<8x128xf32>
      %38 = arith.divf %30, %37 : vector<8x128xf32>
      %c0_30 = arith.constant 0 : index
      %c0_31 = arith.constant 0 : index
      %c0_32 = arith.constant 0 : index
      %39 = vector.load %arg4[%c0_30, %c0_31, %c0_32] : memref<2x8x128xf32, #tpu.memory_space<vmem>>, vector<1x8x128xf32>
      %40 = vector.shape_cast %39 : vector<1x8x128xf32> to vector<8x128xf32>
      %41 = vector.shape_cast %38 : vector<8x128xf32> to vector<1x8x128xf32>
      tpu.vector_store %arg4[%c0_30, %c0_31, %c0_32], %41 {strides = array<i32>} : memref<2x8x128xf32, #tpu.memory_space<vmem>>, vector<1x8x128xf32>,
      %c1_33 = arith.constant 1 : index
      %c0_34 = arith.constant 0 : index
      %c0_35 = arith.constant 0 : index
      %42 = vector.load %arg5[%c1_33, %c0_34, %c0_35] : memref<2x128x8xf32, #tpu.memory_space<vmem>>, vector<1x128x8xf32>
      %43 = vector.shape_cast %42 : vector<1x128x8xf32> to vector<128x8xf32>
      %44 = tpu.transpose %43, [1, 0] : vector<128x8xf32> -> vector<8x128xf32>
      %45 = arith.mulf %44, %44 : vector<8x128xf32>
      %cst_36 = arith.constant dense<0.000000e+00> : vector<8xf32>
      %46 = vector.multi_reduction <add>, %45, %cst_36 [1] : vector<8x128xf32> to vector<8xf32>
      %47 = vector.shape_cast %46 : vector<8xf32> to vector<8x1xf32>
      %48 = math.sqrt %47 : vector<8x1xf32>
      %cst_37 = arith.constant 9.99999996E-13 : f32
      %49 = vector.broadcast %cst_37 : f32 to vector<8x1xf32>
      %50 = arith.maximumf %48, %49 : vector<8x1xf32>
      %51 = vector.broadcast %50 : vector<8x1xf32> to vector<8x128xf32>
      %52 = arith.divf %44, %51 : vector<8x128xf32>
      %c1_38 = arith.constant 1 : index
      %c0_39 = arith.constant 0 : index
      %c0_40 = arith.constant 0 : index
      %53 = vector.load %arg4[%c1_38, %c0_39, %c0_40] : memref<2x8x128xf32, #tpu.memory_space<vmem>>, vector<1x8x128xf32>
      %54 = vector.shape_cast %53 : vector<1x8x128xf32> to vector<8x128xf32>
      %55 = vector.shape_cast %52 : vector<8x128xf32> to vector<1x8x128xf32>
      tpu.vector_store %arg4[%c1_38, %c0_39, %c0_40], %55 {strides = array<i32>} : memref<2x8x128xf32, #tpu.memory_space<vmem>>, vector<1x8x128xf32>,
    } else {
    }
    return
  }
  func.func @transform_0(%arg0: i32, %arg1: i32) -> (i32, i32, i32) {
    %c0_i32 = arith.constant 0 : i32
    %c0_i32_0 = arith.constant 0 : i32
    return %arg0, %c0_i32, %arg1 : i32, i32, i32
  }
  func.func @transform_1(%arg0: i32, %arg1: i32) -> (i32, i32, i32) {
    %c0_i32 = arith.constant 0 : i32
    %c0_i32_0 = arith.constant 0 : i32
    return %arg0, %c0_i32, %arg1 : i32, i32, i32
  }
  func.func @transform_2(%arg0: i32, %arg1: i32) -> (i32, i32, i32) {
    %c0_i32 = arith.constant 0 : i32
    %c0_i32_0 = arith.constant 0 : i32
    %c0_i32_1 = arith.constant 0 : i32
    return %arg0, %c0_i32, %c0_i32_0 : i32, i32, i32
  }
}

</mosaic_0001>

<llo_original>
// kernel: tpu_custom_call.1
$region0: #{tpu_custom_call.1}
  #allocation0 [shape = 'u32[]', space=smem, size = 0x4, offset = 0x4, fixed_abs, tag = 'smem constant byte address 0x4 - core index']
  #allocation1 [shape = 'u32[144,128]{1,0:T(1,128)}', space=vmem, size = 0x12000, scoped, tag = 'internal scratch']
  #allocation2 [shape = 'f32[2,128,8]{2,1,0:T(8,128)}', space=vmem, size = 0x20000, scoped, tag = 'scratch operand']
  #allocation3 [shape = 'f32[2,8,1]{2,1,0:T(8,128)}', space=vmem, size = 0x2000, scoped, tag = 'scratch operand']
  %s0 = inlined_call_operand.hbm [shape: f32[2,8,256], index: 0, kind: input, shape index: {}]
  %s1 = inlined_call_operand.hbm [shape: f32[2,128,256], index: 1, kind: input, shape index: {}]
  %s2 = inlined_call_operand.hbm [shape: f32[2,8,128], index: 2, kind: output, shape index: {}]
  %s3 = sld [smem:[#allocation0]]
  $region57: #{tpu_custom_call.1} parent=0
    _
  %s5 = ssub.s32 1, %s3
  %s6 = scalar_select 0, %s5, %s3
  $region1: #{tpu_custom_call.1} parent=0
    #allocation4 [shape = 'u8[16384]{0}', space=vmem, size = 0x4000, scoped, tag = 'input window, operand 0']
    #allocation5 [shape = 's32[2]{0}', space=sflag, size = 0x8, scoped, tag = 'scoped memory for tpu_custom_call.1']
    #allocation6 [shape = 's32[2]{0}', space=sflag, size = 0x8, scoped, tag = 'scoped memory for tpu_custom_call.1']
    #allocation7 [shape = 'u8[262144]{0}', space=vmem, size = 0x40000, scoped, tag = 'input window, operand 1']
    #allocation8 [shape = 's32[2]{0}', space=sflag, size = 0x8, scoped, tag = 'scoped memory for tpu_custom_call.1']
    #allocation9 [shape = 'u8[8192]{0}', space=vmem, size = 0x2000, scoped, tag = 'output window, operand 0, single buffered']
    %7 = vsyncpa [#allocation5], 0
    %s8 = scalar_lea.sflag [#allocation5], 1
    %9 = vsyncpa %s8, 0
    %10 = vsyncpa [#allocation8], 0
    %s11 = scalar_lea.sflag [#allocation8], 1
    %12 = vsyncpa %s11, 0
    %13 = vsyncpa [#allocation6], 0
    loop: start=0, step=1, limit=4
    $region2: #{tpu_custom_call.1} parent=1 // loop_pre_header
      _
    $region3: #{tpu_custom_call.1} parent=1 // loop_header
      %s15 = sphi 0, %s19
      %p16 = scmp.ge.s32.totalorder %s15, 4
      %s22 = sphi 0, %s34
      %s23 = sphi 0, %s30
      %s24 = sphi 0, %s22
      %s25 = sphi 0, %s23
      %s26 = sphi 0, %s24
      %s27 = sphi 0, %s25
      %s39 = sphi 0, %s41
      %s42 = sphi 0, %s39
      %s43 = sphi 0, %s42
      %s59 = sphi 0, %s43
      %s67 = sphi 0, %s69
      %s70 = sphi 0, %s67
      %s71 = sphi 0, %s70
      %s87 = sphi 0, %s71
      %s93 = sphi 0, %s95
      %s96 = sphi 0, %s93
      %s97 = sphi 0, %s96
      %s113 = sphi 0, %s97
    $region4: #{tpu_custom_call.1} parent=1 // loop_header_branch
      %18 = sbr.rel (%p16) target = $region8
    $region5: #{tpu_custom_call.1} parent=1 // loop_body
      %s20 = ssub.s32 %s15, 1
      %s21 = ssub.s32 %s15, 2
      %s28 = sadd.s32 1, %s23
      %p29 = scmp.ge.s32.totalorder %s28, 2
      %s30 = scalar_select %p29, 0, %s28
      %s31 = sadd.s32 1, %s22
      %s32 = scalar_select %p29, %s31, %s22
      %p33 = scmp.ge.s32.totalorder %s32, 1
      %s34 = scalar_select %p33, 0, %s32
      %s35 = ssub.s32 %s22, %s34
      %s36 = ssub.s32 %s23, %s30
      %s37 = sor.u32 %s35, %s36
      %p38 = scmp.eq.s32.totalorder %s37, 0
      %s40 = sadd.s32 %s39, 1
      %s41 = scalar_select %p38, %s39, %s40
      %p44 = pneg %p38
      %p45 = scmp.eq.s32.totalorder %s15, 1
      %p46 = por %p44, %p45
      %p47 = scmp.ne.s32.totalorder %s39, %s42
      %p48 = scmp.eq.s32.totalorder %s15, 0
      %p49 = por %p47, %p48
      %p50 = scmp.ne.s32.totalorder %s39, %s42
      %p51 = scmp.eq.s32.totalorder %s20, 1
      %p52 = por %p50, %p51
      %p53 = scmp.ne.s32.totalorder %s42, %s43
      %p54 = scmp.eq.s32.totalorder %s20, 0
      %p55 = por %p53, %p54
      %p56 = scmp.ne.s32.totalorder %s42, %s43
      %p57 = scmp.eq.s32.totalorder %s21, 1
      %p58 = por %p56, %p57
      %p60 = scmp.ne.s32.totalorder %s43, %s59
      %p61 = scmp.eq.s32.totalorder %s21, 0
      %p62 = por %p60, %p61
      %s63 = ssub.s32 %s22, %s34
      %s64 = ssub.s32 %s23, %s30
      %s65 = sor.u32 %s63, %s64
      %p66 = scmp.eq.s32.totalorder %s65, 0
      %s68 = sadd.s32 %s67, 1
      %s69 = scalar_select %p66, %s67, %s68
      %p72 = pneg %p66
      %p73 = scmp.eq.s32.totalorder %s15, 1
      %p74 = por %p72, %p73
      %p75 = scmp.ne.s32.totalorder %s67, %s70
      %p76 = scmp.eq.s32.totalorder %s15, 0
      %p77 = por %p75, %p76
      %p78 = scmp.ne.s32.totalorder %s67, %s70
      %p79 = scmp.eq.s32.totalorder %s20, 1
      %p80 = por %p78, %p79
      %p81 = scmp.ne.s32.totalorder %s70, %s71
      %p82 = scmp.eq.s32.totalorder %s20, 0
      %p83 = por %p81, %p82
      %p84 = scmp.ne.s32.totalorder %s70, %s71
      %p85 = scmp.eq.s32.totalorder %s21, 1
      %p86 = por %p84, %p85
      %p88 = scmp.ne.s32.totalorder %s71, %s87
      %p89 = scmp.eq.s32.totalorder %s21, 0
      %p90 = por %p88, %p89
      %s91 = ssub.s32 %s22, %s34
      %p92 = scmp.eq.s32.totalorder %s91, 0
      %s94 = sadd.s32 %s93, 1
      %s95 = scalar_select %p92, %s93, %s94
      %p98 = pneg %p92
      %p99 = scmp.eq.s32.totalorder %s15, 1
      %p100 = por %p98, %p99
      %p101 = scmp.ne.s32.totalorder %s93, %s96
      %p102 = scmp.eq.s32.totalorder %s15, 0
      %p103 = por %p101, %p102
      %p104 = scmp.ne.s32.totalorder %s93, %s96
      %p105 = scmp.eq.s32.totalorder %s20, 1
      %p106 = por %p104, %p105
      %p107 = scmp.ne.s32.totalorder %s96, %s97
      %p108 = scmp.eq.s32.totalorder %s20, 0
      %p109 = por %p107, %p108
      %p110 = scmp.ne.s32.totalorder %s96, %s97
      %p111 = scmp.eq.s32.totalorder %s21, 1
      %p112 = por %p110, %p111
      %p114 = scmp.ne.s32.totalorder %s97, %s113
      %p115 = scmp.eq.s32.totalorder %s21, 0
      %p116 = por %p114, %p115
      %p117 = scmp.le.s32.totalorder 1, %s15
      %p118 = scmp.lt.s32.totalorder %s15, 3
      %p119 = pnand %p117, %p118
      %p120 = pneg %p119
      // Predicated region
      $region9: #{tpu_custom_call.1} parent=5 // pred_check
        _
      $region10: #{tpu_custom_call.1} parent=5 // pred_check_branch
        %122 = sbr.rel (%p119) target = $region12
      $region11: #{tpu_custom_call.1} parent=5 // pred_region
        %s123 = ssub.s32 %s15, 1
      $region12: #{tpu_custom_call.1} parent=5 // pred_fallthru
        _
      %p124 = scmp.lt.s32.totalorder %s15, 2
      // Predicated region
      $region13: #{tpu_custom_call.1} parent=5 // pred_check
        %p125 = pneg %p124
      $region14: #{tpu_custom_call.1} parent=5 // pred_check_branch
        %127 = sbr.rel (%p125) target = $region16
      $region15: #{tpu_custom_call.1} parent=5 // pred_region
        // Predicated region
        $region17: #{tpu_custom_call.1} parent=15 // pred_check
          %p128 = pneg %p49
        $region18: #{tpu_custom_call.1} parent=15 // pred_check_branch
          %130 = sbr.rel (%p128) target = $region20
        $region19: #{tpu_custom_call.1} parent=15 // pred_region
          %s131 = sand.u32 %s39, 1
          %s132 = scalar_lea.sflag [#allocation5], %s131
          %s133 = sand.u32 %s39, 1
          %s134 = smul.addr %s133, 16
          %s135 = scalar_lea.vmem [#allocation4], %s134
          %s136 = smul.u32 2, %s22
          %s138 = ssub.s32 256, 256
          %139 = vsyncadd %s132, %s138
          %s140 = smul.addr %s136, 2
          %s141 = sadd.s32 %s23, %s140
          %s142 = smul.addr %s141, 128
          %s143 = scalar_lea.hbm %s0, %s142
          %s144 = sshll.u32 %s135, 4
          %s145 = int_to_ptr.vmem [resolvable:$true] %s144
          %150 = dma.hbm_to_vmem [thread:$0]  %s143, 256, %s145, %s132, 256, 128, 8
        $region20: #{tpu_custom_call.1} parent=15 // pred_fallthru
          _
        // Predicated region
        $region21: #{tpu_custom_call.1} parent=15 // pred_check
          %p151 = pneg %p77
        $region22: #{tpu_custom_call.1} parent=15 // pred_check_branch
          %153 = sbr.rel (%p151) target = $region24
        $region23: #{tpu_custom_call.1} parent=15 // pred_region
          %s154 = sand.u32 %s67, 1
          %s155 = scalar_lea.sflag [#allocation8], %s154
          %s156 = sand.u32 %s67, 1
          %s157 = smul.addr %s156, 256
          %s158 = scalar_lea.vmem [#allocation7], %s157
          %s159 = smul.u32 2, %s22
          %s161 = ssub.s32 4096, 4096
          %162 = vsyncadd %s155, %s161
          %s163 = smul.addr %s159, 32
          %s164 = sadd.s32 %s23, %s163
          %s165 = smul.addr %s164, 128
          %s166 = scalar_lea.hbm %s1, %s165
          %s167 = sshll.u32 %s158, 4
          %s168 = int_to_ptr.vmem [resolvable:$true] %s167
          %173 = dma.hbm_to_vmem [thread:$0]  %s166, 4096, %s168, %s155, 256, 128, 8
        $region24: #{tpu_custom_call.1} parent=15 // pred_fallthru
          _
      $region16: #{tpu_custom_call.1} parent=5 // pred_fallthru
        _
      %p174 = scmp.le.s32.totalorder 1, %s15
      %p175 = scmp.lt.s32.totalorder %s15, 3
      %p176 = pnand %p174, %p175
      %p177 = pneg %p176
      // Predicated region
      $region25: #{tpu_custom_call.1} parent=5 // pred_check
        _
      $region26: #{tpu_custom_call.1} parent=5 // pred_check_branch
        %179 = sbr.rel (%p176) target = $region28
      $region27: #{tpu_custom_call.1} parent=5 // pred_region
        %s180 = ssub.s32 %s15, 1
        %s181 = sand.u32 %s42, 1
        %s182 = scalar_lea.sflag [#allocation5], %s181
        %s183 = sand.u32 %s42, 1
        %s184 = smul.addr %s183, 16
        %s185 = scalar_lea.vmem [#allocation4], %s184
        // Predicated region
        $region29: #{tpu_custom_call.1} parent=27 // pred_check
          %p186 = pneg %p55
        $region30: #{tpu_custom_call.1} parent=27 // pred_check_branch
          %188 = sbr.rel (%p186) target = $region32
        $region31: #{tpu_custom_call.1} parent=27 // pred_region
          %189 = dma.done %s182, 256
        $region32: #{tpu_custom_call.1} parent=27 // pred_fallthru
          _
        %s190 = sand.u32 %s70, 1
        %s191 = scalar_lea.sflag [#allocation8], %s190
        %s192 = sand.u32 %s70, 1
        %s193 = smul.addr %s192, 256
        %s194 = scalar_lea.vmem [#allocation7], %s193
        // Predicated region
        $region33: #{tpu_custom_call.1} parent=27 // pred_check
          %p195 = pneg %p83
        $region34: #{tpu_custom_call.1} parent=27 // pred_check_branch
          %197 = sbr.rel (%p195) target = $region36
        $region35: #{tpu_custom_call.1} parent=27 // pred_region
          %198 = dma.done %s191, 4096
        $region36: #{tpu_custom_call.1} parent=27 // pred_fallthru
          _
        %s199 = sand.u32 %s42, 1
        %s200 = scalar_lea.sflag [#allocation5], %s199
        %s201 = sand.u32 %s42, 1
        %s202 = smul.addr %s201, 16
        %s203 = scalar_lea.vmem [#allocation4], %s202
        %p204 = pneg %p55
        %p205 = pneg %p52
        %s206 = sand.u32 %s70, 1
        %s207 = scalar_lea.sflag [#allocation8], %s206
        %s208 = sand.u32 %s70, 1
        %s209 = smul.addr %s208, 256
        %s210 = scalar_lea.vmem [#allocation7], %s209
        %p211 = pneg %p83
        %p212 = pneg %p80
        %p213 = pneg %p109
        %p214 = pneg %p106
        %s215 = smul.u32 2, %s24
        %s216 = smul.u32 2, %s24
        %s217 = smul.u32 2, %s24
        %p218 = scmp.eq.s32.totalorder %s25, 0
        // Predicated region
        $region37: #{tpu_custom_call.1} parent=27 // pred_check
          %p219 = pneg %p218
        $region38: #{tpu_custom_call.1} parent=27 // pred_check_branch
          %221 = sbr.rel (%p219) target = $region40
        $region39: #{tpu_custom_call.1} parent=27 // pred_region
          %vm222 = vcmask 64512
          %223 = vst.msk [vmem:[#allocation2] sm:$0xff] %vm222, 0.0
          %224 = vst.msk [vmem:[#allocation2 + $0x8] sm:$0xff] %vm222, 0.0
          %225 = vst.msk [vmem:[#allocation2 + $0x10] sm:$0xff] %vm222, 0.0
          %226 = vst.msk [vmem:[#allocation2 + $0x18] sm:$0xff] %vm222, 0.0
          %227 = vst.msk [vmem:[#allocation2 + $0x20] sm:$0xff] %vm222, 0.0
          %228 = vst.msk [vmem:[#allocation2 + $0x28] sm:$0xff] %vm222, 0.0
          %229 = vst.msk [vmem:[#allocation2 + $0x30] sm:$0xff] %vm222, 0.0
          %230 = vst.msk [vmem:[#allocation2 + $0x38] sm:$0xff] %vm222, 0.0
          %231 = vst.msk [vmem:[#allocation2 + $0x40] sm:$0xff] %vm222, 0.0
          %232 = vst.msk [vmem:[#allocation2 + $0x48] sm:$0xff] %vm222, 0.0
          %233 = vst.msk [vmem:[#allocation2 + $0x50] sm:$0xff] %vm222, 0.0
          %234 = vst.msk [vmem:[#allocation2 + $0x58] sm:$0xff] %vm222, 0.0
          %235 = vst.msk [vmem:[#allocation2 + $0x60] sm:$0xff] %vm222, 0.0
          %236 = vst.msk [vmem:[#allocation2 + $0x68] sm:$0xff] %vm222, 0.0
          %237 = vst.msk [vmem:[#allocation2 + $0x70] sm:$0xff] %vm222, 0.0
          %238 = vst.msk [vmem:[#allocation2 + $0x78] sm:$0xff] %vm222, 0.0
          %239 = vst.msk [vmem:[#allocation2 + $0x80] sm:$0xff] %vm222, 0.0
          %240 = vst.msk [vmem:[#allocation2 + $0x88] sm:$0xff] %vm222, 0.0
          %241 = vst.msk [vmem:[#allocation2 + $0x90] sm:$0xff] %vm222, 0.0
          %242 = vst.msk [vmem:[#allocation2 + $0x98] sm:$0xff] %vm222, 0.0
          %243 = vst.msk [vmem:[#allocation2 + $0xa0] sm:$0xff] %vm222, 0.0
          %244 = vst.msk [vmem:[#allocation2 + $0xa8] sm:$0xff] %vm222, 0.0
          %245 = vst.msk [vmem:[#allocation2 + $0xb0] sm:$0xff] %vm222, 0.0
          %246 = vst.msk [vmem:[#allocation2 + $0xb8] sm:$0xff] %vm222, 0.0
          %247 = vst.msk [vmem:[#allocation2 + $0xc0] sm:$0xff] %vm222, 0.0
          %248 = vst.msk [vmem:[#allocation2 + $0xc8] sm:$0xff] %vm222, 0.0
          %249 = vst.msk [vmem:[#allocation2 + $0xd0] sm:$0xff] %vm222, 0.0
          %250 = vst.msk [vmem:[#allocation2 + $0xd8] sm:$0xff] %vm222, 0.0
          %251 = vst.msk [vmem:[#allocation2 + $0xe0] sm:$0xff] %vm222, 0.0
          %252 = vst.msk [vmem:[#allocation2 + $0xe8] sm:$0xff] %vm222, 0.0
          %253 = vst.msk [vmem:[#allocation2 + $0xf0] sm:$0xff] %vm222, 0.0
          %254 = vst.msk [vmem:[#allocation2 + $0xf8] sm:$0xff] %vm222, 0.0
        $region40: #{tpu_custom_call.1} parent=27 // pred_fallthru
          _
        %v255 = vld [vmem:[%s185] sm:$0xff]
        %v256 = vld [vmem:[%s194] sm:$0xff]
        %v257 = vld [vmem:[%s194 + $0x8] sm:$0xff]
        %v258 = vld [vmem:[%s194 + $0x10] sm:$0xff]
        %v259 = vld [vmem:[%s194 + $0x18] sm:$0xff]
        %v260 = vld [vmem:[%s194 + $0x20] sm:$0xff]
        %v261 = vld [vmem:[%s194 + $0x28] sm:$0xff]
        %v262 = vld [vmem:[%s194 + $0x30] sm:$0xff]
        %v263 = vld [vmem:[%s194 + $0x38] sm:$0xff]
        %v264 = vld [vmem:[%s194 + $0x40] sm:$0xff]
        %v265 = vld [vmem:[%s194 + $0x48] sm:$0xff]
        %v266 = vld [vmem:[%s194 + $0x50] sm:$0xff]
        %v267 = vld [vmem:[%s194 + $0x58] sm:$0xff]
        %v268 = vld [vmem:[%s194 + $0x60] sm:$0xff]
        %v269 = vld [vmem:[%s194 + $0x68] sm:$0xff]
        %v270 = vld [vmem:[%s194 + $0x70] sm:$0xff]
        %v271 = vld [vmem:[%s194 + $0x78] sm:$0xff]
        %v272 = vld [vmem:[#allocation2] sm:$0xff]
        %v273 = vld [vmem:[#allocation2 + $0x8] sm:$0xff]
        %v274 = vld [vmem:[#allocation2 + $0x10] sm:$0xff]
        %v275 = vld [vmem:[#allocation2 + $0x18] sm:$0xff]
        %v276 = vld [vmem:[#allocation2 + $0x20] sm:$0xff]
        %v277 = vld [vmem:[#allocation2 + $0x28] sm:$0xff]
        %v278 = vld [vmem:[#allocation2 + $0x30] sm:$0xff]
        %v279 = vld [vmem:[#allocation2 + $0x38] sm:$0xff]
        %v280 = vld [vmem:[#allocation2 + $0x40] sm:$0xff]
        %v281 = vld [vmem:[#allocation2 + $0x48] sm:$0xff]
        %v282 = vld [vmem:[#allocation2 + $0x50] sm:$0xff]
        %v283 = vld [vmem:[#allocation2 + $0x58] sm:$0xff]
        %v284 = vld [vmem:[#allocation2 + $0x60] sm:$0xff]
        %v285 = vld [vmem:[#allocation2 + $0x68] sm:$0xff]
        %v286 = vld [vmem:[#allocation2 + $0x70] sm:$0xff]
        %v287 = vld [vmem:[#allocation2 + $0x78] sm:$0xff]
        %288 = vmatprep.subr.mxu0 0.0
        %289 = vmatpush1.xpose.msra.mxu0 %v255
        %290 = vmatprep.subr.mxu0 0.0
        %291 = vmatpush1.xpose.msra.mxu0 0.0
        %292 = vmatprep.subr.mxu0 0.0
        %293 = vmatpush1.xpose.msra.mxu0 0.0
        %294 = vmatprep.subr.mxu0 0.0
        %295 = vmatpush1.xpose.msra.mxu0 0.0
        %296 = vmatprep.subr.mxu0 0.0
        %297 = vmatpush1.xpose.msra.mxu0 0.0
        %298 = vmatprep.subr.mxu0 0.0
        %299 = vmatpush1.xpose.msra.mxu0 0.0
        %300 = vmatprep.subr.mxu0 0.0
        %301 = vmatpush1.xpose.msra.mxu0 0.0
        %302 = vmatprep.subr.mxu0 0.0
        %303 = vmatpush1.xpose.msra.mxu0 0.0
        %304 = vmatprep.subr.mxu0 0.0
        %305 = vmatpush1.xpose.msra.mxu0 0.0
        %306 = vmatprep.subr.mxu0 0.0
        %307 = vmatpush1.xpose.msra.mxu0 0.0
        %308 = vmatprep.subr.mxu0 0.0
        %309 = vmatpush1.xpose.msra.mxu0 0.0
        %310 = vmatprep.subr.mxu0 0.0
        %311 = vmatpush1.xpose.msra.mxu0 0.0
        %312 = vmatprep.subr.mxu0 0.0
        %313 = vmatpush1.xpose.msra.mxu0 0.0
        %314 = vmatprep.subr.mxu0 0.0
        %315 = vmatpush1.xpose.msra.mxu0 0.0
        %316 = vmatprep.subr.mxu0 0.0
        %317 = vmatpush1.xpose.msra.mxu0 0.0
        %318 = vmatprep.subr.mxu0 0.0
        %319 = vmatpush1.xpose.msra.mxu0 0.0
        %320 = vmatprep.subr.mxu0 0.0
        %321 = vmatpush1.xpose.msra.mxu0 0.0
        %322 = vmatprep.subr.mxu0 0.0
        %323 = vmatpush1.xpose.msra.mxu0 0.0
        %324 = vmatprep.subr.mxu0 0.0
        %325 = vmatpush1.xpose.msra.mxu0 0.0
        %326 = vmatprep.subr.mxu0 0.0
        %327 = vmatpush1.xpose.msra.mxu0 0.0
        %328 = vmatprep.subr.mxu0 0.0
        %329 = vmatpush1.xpose.msra.mxu0 0.0
        %330 = vmatprep.subr.mxu0 0.0
        %331 = vmatpush1.xpose.msra.mxu0 0.0
        %332 = vmatprep.subr.mxu0 0.0
        %333 = vmatpush1.xpose.msra.mxu0 0.0
        %334 = vmatprep.subr.mxu0 0.0
        %335 = vmatpush1.xpose.msra.mxu0 0.0
        %336 = vmatprep.subr.mxu0 0.0
        %337 = vmatpush1.xpose.msra.mxu0 0.0
        %338 = vmatprep.subr.mxu0 0.0
        %339 = vmatpush1.xpose.msra.mxu0 0.0
        %340 = vmatprep.subr.mxu0 0.0
        %341 = vmatpush1.xpose.msra.mxu0 0.0
        %342 = vmatprep.subr.mxu0 0.0
        %343 = vmatpush1.xpose.msra.mxu0 0.0
        %344 = vmatprep.subr.mxu0 0.0
        %345 = vmatpush1.xpose.msra.mxu0 0.0
        %346 = vmatprep.subr.mxu0 0.0
        %347 = vmatpush1.xpose.msra.mxu0 0.0
        %348 = vmatprep.subr.mxu0 0.0
        %349 = vmatpush1.xpose.msra.mxu0 0.0
        %350 = vmatprep.subr.mxu0 0.0
        %351 = vmatpush1.xpose.msra.mxu0 0.0
        %352 = vmatprep.mubr.f32.mxu0 0.0
        %353 = vmatmul.mubr.f32.gmra.mrb[0].mxu0 %v256
        %v354 = vpop.f32.mrb[0].mxu0
        %v355 = vadd.f32 0.0, %v354
        %v356 = vpop.f32.mrb[0].mxu0
        %357 = vmatprep.mubr.f32.mxu0 0.0
        %358 = vmatmul.mubr.f32.gmra.mrb[0].mxu0 %v257
        %v359 = vpop.f32.mrb[0].mxu0
        %v360 = vadd.f32 0.0, %v359
        %v361 = vpop.f32.mrb[0].mxu0
        %362 = vmatprep.mubr.f32.mxu0 0.0
        %363 = vmatmul.mubr.f32.gmra.mrb[0].mxu0 %v258
        %v364 = vpop.f32.mrb[0].mxu0
        %v365 = vadd.f32 0.0, %v364
        %v366 = vpop.f32.mrb[0].mxu0
        %367 = vmatprep.mubr.f32.mxu0 0.0
        %368 = vmatmul.mubr.f32.gmra.mrb[0].mxu0 %v259
        %v369 = vpop.f32.mrb[0].mxu0
        %v370 = vadd.f32 0.0, %v369
        %v371 = vpop.f32.mrb[0].mxu0
        %372 = vmatprep.mubr.f32.mxu0 0.0
        %373 = vmatmul.mubr.f32.gmra.mrb[0].mxu0 %v260
        %v374 = vpop.f32.mrb[0].mxu0
        %v375 = vadd.f32 0.0, %v374
        %v376 = vpop.f32.mrb[0].mxu0
        %377 = vmatprep.mubr.f32.mxu0 0.0
        %378 = vmatmul.mubr.f32.gmra.mrb[0].mxu0 %v261
        %v379 = vpop.f32.mrb[0].mxu0
        %v380 = vadd.f32 0.0, %v379
        %v381 = vpop.f32.mrb[0].mxu0
        %382 = vmatprep.mubr.f32.mxu0 0.0
        %383 = vmatmul.mubr.f32.gmra.mrb[0].mxu0 %v262
        %v384 = vpop.f32.mrb[0].mxu0
        %v385 = vadd.f32 0.0, %v384
        %v386 = vpop.f32.mrb[0].mxu0
        %387 = vmatprep.mubr.f32.mxu0 0.0
        %388 = vmatmul.mubr.f32.gmra.mrb[0].mxu0 %v263
        %v389 = vpop.f32.mrb[0].mxu0
        %v390 = vadd.f32 0.0, %v389
        %v391 = vpop.f32.mrb[0].mxu0
        %392 = vmatprep.mubr.f32.mxu0 0.0
        %393 = vmatmul.mubr.f32.gmra.mrb[0].mxu0 %v264
        %v394 = vpop.f32.mrb[0].mxu0
        %v395 = vadd.f32 0.0, %v394
        %v396 = vpop.f32.mrb[0].mxu0
        %397 = vmatprep.mubr.f32.mxu0 0.0
        %398 = vmatmul.mubr.f32.gmra.mrb[0].mxu0 %v265
        %v399 = vpop.f32.mrb[0].mxu0
        %v400 = vadd.f32 0.0, %v399
        %v401 = vpop.f32.mrb[0].mxu0
        %402 = vmatprep.mubr.f32.mxu0 0.0
        %403 = vmatmul.mubr.f32.gmra.mrb[0].mxu0 %v266
        %v404 = vpop.f32.mrb[0].mxu0
        %v405 = vadd.f32 0.0, %v404
        %v406 = vpop.f32.mrb[0].mxu0
        %407 = vmatprep.mubr.f32.mxu0 0.0
        %408 = vmatmul.mubr.f32.gmra.mrb[0].mxu0 %v267
        %v409 = vpop.f32.mrb[0].mxu0
        %v410 = vadd.f32 0.0, %v409
        %v411 = vpop.f32.mrb[0].mxu0
        %412 = vmatprep.mubr.f32.mxu0 0.0
        %413 = vmatmul.mubr.f32.gmra.mrb[0].mxu0 %v268
        %v414 = vpop.f32.mrb[0].mxu0
        %v415 = vadd.f32 0.0, %v414
        %v416 = vpop.f32.mrb[0].mxu0
        %417 = vmatprep.mubr.f32.mxu0 0.0
        %418 = vmatmul.mubr.f32.gmra.mrb[0].mxu0 %v269
        %v419 = vpop.f32.mrb[0].mxu0
        %v420 = vadd.f32 0.0, %v419
        %v421 = vpop.f32.mrb[0].mxu0
        %422 = vmatprep.mubr.f32.mxu0 0.0
        %423 = vmatmul.mubr.f32.gmra.mrb[0].mxu0 %v270
        %v424 = vpop.f32.mrb[0].mxu0
        %v425 = vadd.f32 0.0, %v424
        %v426 = vpop.f32.mrb[0].mxu0
        %427 = vmatprep.mubr.f32.mxu0 0.0
        %428 = vmatmul.mubr.f32.gmra.mrb[0].mxu0 %v271
        %v429 = vpop.f32.mrb[0].mxu0
        %v430 = vadd.f32 0.0, %v429
        %v431 = vpop.f32.mrb[0].mxu0
        %432 = vdwg.mxu0
        %v433 = vadd.f32 %v272, %v355
        %v434 = vadd.f32 %v273, %v360
        %v435 = vadd.f32 %v274, %v365
        %v436 = vadd.f32 %v275, %v370
        %v437 = vadd.f32 %v276, %v375
        %v438 = vadd.f32 %v277, %v380
        %v439 = vadd.f32 %v278, %v385
        %v440 = vadd.f32 %v279, %v390
        %v441 = vadd.f32 %v280, %v395
        %v442 = vadd.f32 %v281, %v400
        %v443 = vadd.f32 %v282, %v405
        %v444 = vadd.f32 %v283, %v410
        %v445 = vadd.f32 %v284, %v415
        %v446 = vadd.f32 %v285, %v420
        %v447 = vadd.f32 %v286, %v425
        %v448 = vadd.f32 %v287, %v430
        %vm449 = vcmask 64512
        %450 = vst.msk [vmem:[#allocation2] sm:$0xff] %vm449, %v433
        %451 = vst.msk [vmem:[#allocation2 + $0x8] sm:$0xff] %vm449, %v434
        %452 = vst.msk [vmem:[#allocation2 + $0x10] sm:$0xff] %vm449, %v435
        %453 = vst.msk [vmem:[#allocation2 + $0x18] sm:$0xff] %vm449, %v436
        %454 = vst.msk [vmem:[#allocation2 + $0x20] sm:$0xff] %vm449, %v437
        %455 = vst.msk [vmem:[#allocation2 + $0x28] sm:$0xff] %vm449, %v438
        %456 = vst.msk [vmem:[#allocation2 + $0x30] sm:$0xff] %vm449, %v439
        %457 = vst.msk [vmem:[#allocation2 + $0x38] sm:$0xff] %vm449, %v440
        %458 = vst.msk [vmem:[#allocation2 + $0x40] sm:$0xff] %vm449, %v441
        %459 = vst.msk [vmem:[#allocation2 + $0x48] sm:$0xff] %vm449, %v442
        %460 = vst.msk [vmem:[#allocation2 + $0x50] sm:$0xff] %vm449, %v443
        %461 = vst.msk [vmem:[#allocation2 + $0x58] sm:$0xff] %vm449, %v444
        %462 = vst.msk [vmem:[#allocation2 + $0x60] sm:$0xff] %vm449, %v445
        %463 = vst.msk [vmem:[#allocation2 + $0x68] sm:$0xff] %vm449, %v446
        %464 = vst.msk [vmem:[#allocation2 + $0x70] sm:$0xff] %vm449, %v447
        %465 = vst.msk [vmem:[#allocation2 + $0x78] sm:$0xff] %vm449, %v448
        %s466 = scalar_lea.vmem %s185, 8 [#allocation4]
        %v467 = vld [vmem:[%s466] sm:$0xff]
        %s468 = scalar_lea.vmem %s194, 128 [#allocation7]
        %v469 = vld [vmem:[%s468] sm:$0xff]
        %v470 = vld [vmem:[%s468 + $0x8] sm:$0xff]
        %v471 = vld [vmem:[%s468 + $0x10] sm:$0xff]
        %v472 = vld [vmem:[%s468 + $0x18] sm:$0xff]
        %v473 = vld [vmem:[%s468 + $0x20] sm:$0xff]
        %v474 = vld [vmem:[%s468 + $0x28] sm:$0xff]
        %v475 = vld [vmem:[%s468 + $0x30] sm:$0xff]
        %v476 = vld [vmem:[%s468 + $0x38] sm:$0xff]
        %v477 = vld [vmem:[%s468 + $0x40] sm:$0xff]
        %v478 = vld [vmem:[%s468 + $0x48] sm:$0xff]
        %v479 = vld [vmem:[%s468 + $0x50] sm:$0xff]
        %v480 = vld [vmem:[%s468 + $0x58] sm:$0xff]
        %v481 = vld [vmem:[%s468 + $0x60] sm:$0xff]
        %v482 = vld [vmem:[%s468 + $0x68] sm:$0xff]
        %v483 = vld [vmem:[%s468 + $0x70] sm:$0xff]
        %v484 = vld [vmem:[%s468 + $0x78] sm:$0xff]
        %s485 = scalar_lea.vmem [#allocation2], 128
        %v486 = vld [vmem:[%s485] sm:$0xff]
        %v487 = vld [vmem:[%s485 + $0x8] sm:$0xff]
        %v488 = vld [vmem:[%s485 + $0x10] sm:$0xff]
        %v489 = vld [vmem:[%s485 + $0x18] sm:$0xff]
        %v490 = vld [vmem:[%s485 + $0x20] sm:$0xff]
        %v491 = vld [vmem:[%s485 + $0x28] sm:$0xff]
        %v492 = vld [vmem:[%s485 + $0x30] sm:$0xff]
        %v493 = vld [vmem:[%s485 + $0x38] sm:$0xff]
        %v494 = vld [vmem:[%s485 + $0x40] sm:$0xff]
        %v495 = vld [vmem:[%s485 + $0x48] sm:$0xff]
        %v496 = vld [vmem:[%s485 + $0x50] sm:$0xff]
        %v497 = vld [vmem:[%s485 + $0x58] sm:$0xff]
        %v498 = vld [vmem:[%s485 + $0x60] sm:$0xff]
        %v499 = vld [vmem:[%s485 + $0x68] sm:$0xff]
        %v500 = vld [vmem:[%s485 + $0x70] sm:$0xff]
        %v501 = vld [vmem:[%s485 + $0x78] sm:$0xff]
        %502 = vmatprep.subr.mxu0 0.0
        %503 = vmatpush1.xpose.msra.mxu0 %v467
        %504 = vmatprep.subr.mxu0 0.0
        %505 = vmatpush1.xpose.msra.mxu0 0.0
        %506 = vmatprep.subr.mxu0 0.0
        %507 = vmatpush1.xpose.msra.mxu0 0.0
        %508 = vmatprep.subr.mxu0 0.0
        %509 = vmatpush1.xpose.msra.mxu0 0.0
        %510 = vmatprep.subr.mxu0 0.0
        %511 = vmatpush1.xpose.msra.mxu0 0.0
        %512 = vmatprep.subr.mxu0 0.0
        %513 = vmatpush1.xpose.msra.mxu0 0.0
        %514 = vmatprep.subr.mxu0 0.0
        %515 = vmatpush1.xpose.msra.mxu0 0.0
        %516 = vmatprep.subr.mxu0 0.0
        %517 = vmatpush1.xpose.msra.mxu0 0.0
        %518 = vmatprep.subr.mxu0 0.0
        %519 = vmatpush1.xpose.msra.mxu0 0.0
        %520 = vmatprep.subr.mxu0 0.0
        %521 = vmatpush1.xpose.msra.mxu0 0.0
        %522 = vmatprep.subr.mxu0 0.0
        %523 = vmatpush1.xpose.msra.mxu0 0.0
        %524 = vmatprep.subr.mxu0 0.0
        %525 = vmatpush1.xpose.msra.mxu0 0.0
        %526 = vmatprep.subr.mxu0 0.0
        %527 = vmatpush1.xpose.msra.mxu0 0.0
        %528 = vmatprep.subr.mxu0 0.0
        %529 = vmatpush1.xpose.msra.mxu0 0.0
        %530 = vmatprep.subr.mxu0 0.0
        %531 = vmatpush1.xpose.msra.mxu0 0.0
        %532 = vmatprep.subr.mxu0 0.0
        %533 = vmatpush1.xpose.msra.mxu0 0.0
        %534 = vmatprep.subr.mxu0 0.0
        %535 = vmatpush1.xpose.msra.mxu0 0.0
        %536 = vmatprep.subr.mxu0 0.0
        %537 = vmatpush1.xpose.msra.mxu0 0.0
        %538 = vmatprep.subr.mxu0 0.0
        %539 = vmatpush1.xpose.msra.mxu0 0.0
        %540 = vmatprep.subr.mxu0 0.0
        %541 = vmatpush1.xpose.msra.mxu0 0.0
        %542 = vmatprep.subr.mxu0 0.0
        %543 = vmatpush1.xpose.msra.mxu0 0.0
        %544 = vmatprep.subr.mxu0 0.0
        %545 = vmatpush1.xpose.msra.mxu0 0.0
        %546 = vmatprep.subr.mxu0 0.0
        %547 = vmatpush1.xpose.msra.mxu0 0.0
        %548 = vmatprep.subr.mxu0 0.0
        %549 = vmatpush1.xpose.msra.mxu0 0.0
        %550 = vmatprep.subr.mxu0 0.0
        %551 = vmatpush1.xpose.msra.mxu0 0.0
        %552 = vmatprep.subr.mxu0 0.0
        %553 = vmatpush1.xpose.msra.mxu0 0.0
        %554 = vmatprep.subr.mxu0 0.0
        %555 = vmatpush1.xpose.msra.mxu0 0.0
        %556 = vmatprep.subr.mxu0 0.0
        %557 = vmatpush1.xpose.msra.mxu0 0.0
        %558 = vmatprep.subr.mxu0 0.0
        %559 = vmatpush1.xpose.msra.mxu0 0.0
        %560 = vmatprep.subr.mxu0 0.0
        %561 = vmatpush1.xpose.msra.mxu0 0.0
        %562 = vmatprep.subr.mxu0 0.0
        %563 = vmatpush1.xpose.msra.mxu0 0.0
        %564 = vmatprep.subr.mxu0 0.0
        %565 = vmatpush1.xpose.msra.mxu0 0.0
        %566 = vmatprep.mubr.f32.mxu0 0.0
        %567 = vmatmul.mubr.f32.gmra.mrb[0].mxu0 %v469
        %v568 = vpop.f32.mrb[0].mxu0
        %v569 = vadd.f32 0.0, %v568
        %v570 = vpop.f32.mrb[0].mxu0
        %571 = vmatprep.mubr.f32.mxu0 0.0
        %572 = vmatmul.mubr.f32.gmra.mrb[0].mxu0 %v470
        %v573 = vpop.f32.mrb[0].mxu0
        %v574 = vadd.f32 0.0, %v573
        %v575 = vpop.f32.mrb[0].mxu0
        %576 = vmatprep.mubr.f32.mxu0 0.0
        %577 = vmatmul.mubr.f32.gmra.mrb[0].mxu0 %v471
        %v578 = vpop.f32.mrb[0].mxu0
        %v579 = vadd.f32 0.0, %v578
        %v580 = vpop.f32.mrb[0].mxu0
        %581 = vmatprep.mubr.f32.mxu0 0.0
        %582 = vmatmul.mubr.f32.gmra.mrb[0].mxu0 %v472
        %v583 = vpop.f32.mrb[0].mxu0
        %v584 = vadd.f32 0.0, %v583
        %v585 = vpop.f32.mrb[0].mxu0
        %586 = vmatprep.mubr.f32.mxu0 0.0
        %587 = vmatmul.mubr.f32.gmra.mrb[0].mxu0 %v473
        %v588 = vpop.f32.mrb[0].mxu0
        %v589 = vadd.f32 0.0, %v588
        %v590 = vpop.f32.mrb[0].mxu0
        %591 = vmatprep.mubr.f32.mxu0 0.0
        %592 = vmatmul.mubr.f32.gmra.mrb[0].mxu0 %v474
        %v593 = vpop.f32.mrb[0].mxu0
        %v594 = vadd.f32 0.0, %v593
        %v595 = vpop.f32.mrb[0].mxu0
        %596 = vmatprep.mubr.f32.mxu0 0.0
        %597 = vmatmul.mubr.f32.gmra.mrb[0].mxu0 %v475
        %v598 = vpop.f32.mrb[0].mxu0
        %v599 = vadd.f32 0.0, %v598
        %v600 = vpop.f32.mrb[0].mxu0
        %601 = vmatprep.mubr.f32.mxu0 0.0
        %602 = vmatmul.mubr.f32.gmra.mrb[0].mxu0 %v476
        %v603 = vpop.f32.mrb[0].mxu0
        %v604 = vadd.f32 0.0, %v603
        %v605 = vpop.f32.mrb[0].mxu0
        %606 = vmatprep.mubr.f32.mxu0 0.0
        %607 = vmatmul.mubr.f32.gmra.mrb[0].mxu0 %v477
        %v608 = vpop.f32.mrb[0].mxu0
        %v609 = vadd.f32 0.0, %v608
        %v610 = vpop.f32.mrb[0].mxu0
        %611 = vmatprep.mubr.f32.mxu0 0.0
        %612 = vmatmul.mubr.f32.gmra.mrb[0].mxu0 %v478
        %v613 = vpop.f32.mrb[0].mxu0
        %v614 = vadd.f32 0.0, %v613
        %v615 = vpop.f32.mrb[0].mxu0
        %616 = vmatprep.mubr.f32.mxu0 0.0
        %617 = vmatmul.mubr.f32.gmra.mrb[0].mxu0 %v479
        %v618 = vpop.f32.mrb[0].mxu0
        %v619 = vadd.f32 0.0, %v618
        %v620 = vpop.f32.mrb[0].mxu0
        %621 = vmatprep.mubr.f32.mxu0 0.0
        %622 = vmatmul.mubr.f32.gmra.mrb[0].mxu0 %v480
        %v623 = vpop.f32.mrb[0].mxu0
        %v624 = vadd.f32 0.0, %v623
        %v625 = vpop.f32.mrb[0].mxu0
        %626 = vmatprep.mubr.f32.mxu0 0.0
        %627 = vmatmul.mubr.f32.gmra.mrb[0].mxu0 %v481
        %v628 = vpop.f32.mrb[0].mxu0
        %v629 = vadd.f32 0.0, %v628
        %v630 = vpop.f32.mrb[0].mxu0
        %631 = vmatprep.mubr.f32.mxu0 0.0
        %632 = vmatmul.mubr.f32.gmra.mrb[0].mxu0 %v482
        %v633 = vpop.f32.mrb[0].mxu0
        %v634 = vadd.f32 0.0, %v633
        %v635 = vpop.f32.mrb[0].mxu0
        %636 = vmatprep.mubr.f32.mxu0 0.0
        %637 = vmatmul.mubr.f32.gmra.mrb[0].mxu0 %v483
        %v638 = vpop.f32.mrb[0].mxu0
        %v639 = vadd.f32 0.0, %v638
        %v640 = vpop.f32.mrb[0].mxu0
        %641 = vmatprep.mubr.f32.mxu0 0.0
        %642 = vmatmul.mubr.f32.gmra.mrb[0].mxu0 %v484
        %v643 = vpop.f32.mrb[0].mxu0
        %v644 = vadd.f32 0.0, %v643
        %v645 = vpop.f32.mrb[0].mxu0
        %646 = vdwg.mxu0
        %v647 = vadd.f32 %v486, %v569
        %v648 = vadd.f32 %v487, %v574
        %v649 = vadd.f32 %v488, %v579
        %v650 = vadd.f32 %v489, %v584
        %v651 = vadd.f32 %v490, %v589
        %v652 = vadd.f32 %v491, %v594
        %v653 = vadd.f32 %v492, %v599
        %v654 = vadd.f32 %v493, %v604
        %v655 = vadd.f32 %v494, %v609
        %v656 = vadd.f32 %v495, %v614
        %v657 = vadd.f32 %v496, %v619
        %v658 = vadd.f32 %v497, %v624
        %v659 = vadd.f32 %v498, %v629
        %v660 = vadd.f32 %v499, %v634
        %v661 = vadd.f32 %v500, %v639
        %v662 = vadd.f32 %v501, %v644
        %663 = vst.msk [vmem:[%s485] sm:$0xff] %vm449, %v647
        %664 = vst.msk [vmem:[%s485 + $0x8] sm:$0xff] %vm449, %v648
        %665 = vst.msk [vmem:[%s485 + $0x10] sm:$0xff] %vm449, %v649
        %666 = vst.msk [vmem:[%s485 + $0x18] sm:$0xff] %vm449, %v650
        %667 = vst.msk [vmem:[%s485 + $0x20] sm:$0xff] %vm449, %v651
        %668 = vst.msk [vmem:[%s485 + $0x28] sm:$0xff] %vm449, %v652
        %669 = vst.msk [vmem:[%s485 + $0x30] sm:$0xff] %vm449, %v653
        %670 = vst.msk [vmem:[%s485 + $0x38] sm:$0xff] %vm449, %v654
        %671 = vst.msk [vmem:[%s485 + $0x40] sm:$0xff] %vm449, %v655
        %672 = vst.msk [vmem:[%s485 + $0x48] sm:$0xff] %vm449, %v656
        %673 = vst.msk [vmem:[%s485 + $0x50] sm:$0xff] %vm449, %v657
        %674 = vst.msk [vmem:[%s485 + $0x58] sm:$0xff] %vm449, %v658
        %675 = vst.msk [vmem:[%s485 + $0x60] sm:$0xff] %vm449, %v659
        %676 = vst.msk [vmem:[%s485 + $0x68] sm:$0xff] %vm449, %v660
        %677 = vst.msk [vmem:[%s485 + $0x70] sm:$0xff] %vm449, %v661
        %678 = vst.msk [vmem:[%s485 + $0x78] sm:$0xff] %vm449, %v662
        %p679 = scmp.eq.s32.totalorder %s25, 1
        // Predicated region
        $region41: #{tpu_custom_call.1} parent=27 // pred_check
          %p680 = pneg %p679
        $region42: #{tpu_custom_call.1} parent=27 // pred_check_branch
          %682 = sbr.rel (%p680) target = $region44
        $region43: #{tpu_custom_call.1} parent=27 // pred_region
          %v683 = vld [vmem:[#allocation2] sm:$0xff]
          %v684 = vld [vmem:[#allocation2 + $0x8] sm:$0xff]
          %v685 = vld [vmem:[#allocation2 + $0x10] sm:$0xff]
          %v686 = vld [vmem:[#allocation2 + $0x18] sm:$0xff]
          %v687 = vld [vmem:[#allocation2 + $0x20] sm:$0xff]
          %v688 = vld [vmem:[#allocation2 + $0x28] sm:$0xff]
          %v689 = vld [vmem:[#allocation2 + $0x30] sm:$0xff]
          %v690 = vld [vmem:[#allocation2 + $0x38] sm:$0xff]
          %v691 = vld [vmem:[#allocation2 + $0x40] sm:$0xff]
          %v692 = vld [vmem:[#allocation2 + $0x48] sm:$0xff]
          %v693 = vld [vmem:[#allocation2 + $0x50] sm:$0xff]
          %v694 = vld [vmem:[#allocation2 + $0x58] sm:$0xff]
          %v695 = vld [vmem:[#allocation2 + $0x60] sm:$0xff]
          %v696 = vld [vmem:[#allocation2 + $0x68] sm:$0xff]
          %v697 = vld [vmem:[#allocation2 + $0x70] sm:$0xff]
          %v698 = vld [vmem:[#allocation2 + $0x78] sm:$0xff]
          %699 = vxpose.xlu0.b32.start [1/16] %v683, 128
          %700 = vxpose.xlu0.b32.cont [2/16] %v684, 128
          %701 = vxpose.xlu0.b32.cont [3/16] %v685, 128
          %702 = vxpose.xlu0.b32.cont [4/16] %v686, 128
          %703 = vxpose.xlu0.b32.cont [5/16] %v687, 128
          %704 = vxpose.xlu0.b32.cont [6/16] %v688, 128
          %705 = vxpose.xlu0.b32.cont [7/16] %v689, 128
          %706 = vxpose.xlu0.b32.cont [8/16] %v690, 128
          %707 = vxpose.xlu0.b32.cont [9/16] %v691, 128
          %708 = vxpose.xlu0.b32.cont [10/16] %v692, 128
          %709 = vxpose.xlu0.b32.cont [11/16] %v693, 128
          %710 = vxpose.xlu0.b32.cont [12/16] %v694, 128
          %711 = vxpose.xlu0.b32.cont [13/16] %v695, 128
          %712 = vxpose.xlu0.b32.cont [14/16] %v696, 128
          %713 = vxpose.xlu0.b32.cont [15/16] %v697, 128
          %714 = vxpose.xlu0.b32.end [16/16] %v698, 128
          %v715 = vpop.trf.xlu0
          %v716 = vpop.trf.xlu0
          %v717 = vpop.trf.xlu0
          %v718 = vpop.trf.xlu0
          %v719 = vpop.trf.xlu0
          %v720 = vpop.trf.xlu0
          %v721 = vpop.trf.xlu0
          %v722 = vpop.trf.xlu0
          %v723 = vpop.trf.xlu0
          %v724 = vpop.trf.xlu0
          %v725 = vpop.trf.xlu0
          %v726 = vpop.trf.xlu0
          %v727 = vpop.trf.xlu0
          %v728 = vpop.trf.xlu0
          %v729 = vpop.trf.xlu0
          %v730 = vpop.trf.xlu0
          %v731 = vmul.f32 %v715, %v715
          %732 = vadd.xlane.f32.xlu0 %v731
          %v733 = vpop.xlane.xlu0 %732
          %v734 = vrsqrt.pop %v733
          %v735 = vmul.f32 %v733, %v734
          %vm736 = vcmp.eq.f32.partialorder %v733, inf
          %v737 = vsel %vm736, %v733, %v735
          %vm738 = vcmp.eq.f32.partialorder %v733, 0.0
          %v739 = vand.u32 %v733, 2147483648
          %v740 = vsel %vm738, %v739, %v737
          %v741 = vmax.f32 %v740, 1e-12
          %v742 = vrcp.pop %v741
          %v743 = vmul.f32 %v715, %v742
          %744 = vst [vmem:[#allocation9] sm:$0xff] %v743
          %v745 = vld [vmem:[%s485] sm:$0xff]
          %v746 = vld [vmem:[%s485 + $0x8] sm:$0xff]
          %v747 = vld [vmem:[%s485 + $0x10] sm:$0xff]
          %v748 = vld [vmem:[%s485 + $0x18] sm:$0xff]
          %v749 = vld [vmem:[%s485 + $0x20] sm:$0xff]
          %v750 = vld [vmem:[%s485 + $0x28] sm:$0xff]
          %v751 = vld [vmem:[%s485 + $0x30] sm:$0xff]
          %v752 = vld [vmem:[%s485 + $0x38] sm:$0xff]
          %v753 = vld [vmem:[%s485 + $0x40] sm:$0xff]
          %v754 = vld [vmem:[%s485 + $0x48] sm:$0xff]
          %v755 = vld [vmem:[%s485 + $0x50] sm:$0xff]
          %v756 = vld [vmem:[%s485 + $0x58] sm:$0xff]
          %v757 = vld [vmem:[%s485 + $0x60] sm:$0xff]
          %v758 = vld [vmem:[%s485 + $0x68] sm:$0xff]
          %v759 = vld [vmem:[%s485 + $0x70] sm:$0xff]
          %v760 = vld [vmem:[%s485 + $0x78] sm:$0xff]
          %761 = vxpose.xlu0.b32.start [1/16] %v745, 128
          %762 = vxpose.xlu0.b32.cont [2/16] %v746, 128
          %763 = vxpose.xlu0.b32.cont [3/16] %v747, 128
          %764 = vxpose.xlu0.b32.cont [4/16] %v748, 128
          %765 = vxpose.xlu0.b32.cont [5/16] %v749, 128
          %766 = vxpose.xlu0.b32.cont [6/16] %v750, 128
          %767 = vxpose.xlu0.b32.cont [7/16] %v751, 128
          %768 = vxpose.xlu0.b32.cont [8/16] %v752, 128
          %769 = vxpose.xlu0.b32.cont [9/16] %v753, 128
          %770 = vxpose.xlu0.b32.cont [10/16] %v754, 128
          %771 = vxpose.xlu0.b32.cont [11/16] %v755, 128
          %772 = vxpose.xlu0.b32.cont [12/16] %v756, 128
          %773 = vxpose.xlu0.b32.cont [13/16] %v757, 128
          %774 = vxpose.xlu0.b32.cont [14/16] %v758, 128
          %775 = vxpose.xlu0.b32.cont [15/16] %v759, 128
          %776 = vxpose.xlu0.b32.end [16/16] %v760, 128
          %v777 = vpop.trf.xlu0
          %v778 = vpop.trf.xlu0
          %v779 = vpop.trf.xlu0
          %v780 = vpop.trf.xlu0
          %v781 = vpop.trf.xlu0
          %v782 = vpop.trf.xlu0
          %v783 = vpop.trf.xlu0
          %v784 = vpop.trf.xlu0
          %v785 = vpop.trf.xlu0
          %v786 = vpop.trf.xlu0
          %v787 = vpop.trf.xlu0
          %v788 = vpop.trf.xlu0
          %v789 = vpop.trf.xlu0
          %v790 = vpop.trf.xlu0
          %v791 = vpop.trf.xlu0
          %v792 = vpop.trf.xlu0
          %v793 = vmul.f32 %v777, %v777
          %794 = vadd.xlane.f32.xlu0 %v793
          %v795 = vpop.xlane.xlu0 %794
          %v796 = vrsqrt.pop %v795
          %v797 = vmul.f32 %v795, %v796
          %vm798 = vcmp.eq.f32.partialorder %v795, inf
          %v799 = vsel %vm798, %v795, %v797
          %vm800 = vcmp.eq.f32.partialorder %v795, 0.0
          %v801 = vand.u32 %v795, 2147483648
          %v802 = vsel %vm800, %v801, %v799
          %v803 = vmax.f32 %v802, 1e-12
          %v804 = vrcp.pop %v803
          %v805 = vmul.f32 %v777, %v804
          %s806 = scalar_lea.vmem [#allocation9], 8
          %807 = vst [vmem:[%s806] sm:$0xff] %v805
        $region44: #{tpu_custom_call.1} parent=27 // pred_fallthru
          _
        // Predicated region
        $region45: #{tpu_custom_call.1} parent=27 // pred_check
          %p808 = pneg %p106
        $region46: #{tpu_custom_call.1} parent=27 // pred_check_branch
          %810 = sbr.rel (%p808) target = $region48
        $region47: #{tpu_custom_call.1} parent=27 // pred_region
          %s811 = smul.u32 2, %s24
          %s813 = ssub.s32 256, 256
          %814 = vsyncadd [#allocation6], %s813
          %s815 = smul.addr %s811, 128
          %s816 = scalar_lea.hbm %s2, %s815
          %s817 = sshll.u32 [#allocation9], 4
          %s818 = int_to_ptr.vmem [resolvable:$true] %s817
          %823 = dma.vmem_to_hbm [thread:$0]  %s818, 256, %s816, [#allocation6], 128, 128, 8
        $region48: #{tpu_custom_call.1} parent=27 // pred_fallthru
          _
        // Predicated region
        $region49: #{tpu_custom_call.1} parent=27 // pred_check
          %p824 = pneg %p106
        $region50: #{tpu_custom_call.1} parent=27 // pred_check_branch
          %826 = sbr.rel (%p824) target = $region52
        $region51: #{tpu_custom_call.1} parent=27 // pred_region
          %827 = dma.done [#allocation6], 256
        $region52: #{tpu_custom_call.1} parent=27 // pred_fallthru
          _
      $region28: #{tpu_custom_call.1} parent=5 // pred_fallthru
        _
      %p828 = scmp.le.s32.totalorder 2, %s15
      // Predicated region
      $region53: #{tpu_custom_call.1} parent=5 // pred_check
        %p829 = pneg %p828
      $region54: #{tpu_custom_call.1} parent=5 // pred_check_branch
        %831 = sbr.rel (%p829) target = $region56
      $region55: #{tpu_custom_call.1} parent=5 // pred_region
        %s832 = ssub.s32 %s15, 2
      $region56: #{tpu_custom_call.1} parent=5 // pred_fallthru
        _
    $region6: #{tpu_custom_call.1} parent=1 // loop_footer
      %s19 = sadd.s32 1, %s15
    $region7: #{tpu_custom_call.1} parent=1 // loop_footer_branch
      %14 = sbr.rel target = $region3
    $region8: #{tpu_custom_call.1} parent=1 // loop_exit
      _
    %833 = vsyncpa [#allocation5], 1
    %s834 = scalar_lea.sflag [#allocation5], 1
    %835 = vsyncpa %s834, 1
    %836 = vsyncpa [#allocation8], 1
    %s837 = scalar_lea.sflag [#allocation8], 1
    %838 = vsyncpa %s837, 1
    %839 = vsyncpa [#allocation6], 1
    %s840 = scalar_lea.sflag [#allocation6], 1
    %841 = vsyncpa %s840, 1

</llo_original>
